<compile_context>
chip_gen: v5e
topology: v5e:2x2
jax: 0.10.0
libtpu: 0.0.40
codegen_flags: <defaults>
</compile_context>

<pallas_src>
import functools

import jax
import jax.numpy as jnp
from jax import lax
from jax.experimental import pallas as pl
from jax.experimental.pallas import tpu as pltpu

_BN_EPS = 1e-5
_MAX_LANE_TILE = 131072            # lanes per block (multiple of 128)
_VMEM_LIMIT_BYTES = 32 * 1024 * 1024


def _choose_lane_tile(L: int, max_lanes: int) -> int:
    """TL = full L if it fits, else the largest multiple of 128 <= max_lanes."""
    if L <= max_lanes:
        return L
    return max(128, (max_lanes // 128) * 128)


def _stats_kernel(mu0_ref, x_ref, xxt_ref, xsum_ref, *,
                  length, tile_l, tiles_per_split):
    """Accumulate centered sufficient statistics of one batch over L-tiles.

    mu0_ref:  (C_in, 1)     per-channel mean pre-estimate (centering point)
    x_ref:    (C_in, TL)    one L-tile of one batch element
    xxt_ref:  (C_in, C_in)  accumulates sum_l (x-mu0)(x-mu0)^T  (revisited over L)
    xsum_ref: (C_in, 1)     accumulates sum_l (x-mu0)
    """
    l = pl.program_id(2)

    @pl.when(l == 0)
    def _init():
        xxt_ref[...] = jnp.zeros_like(xxt_ref)
        xsum_ref[...] = jnp.zeros_like(xsum_ref)

    # Global L-tile index (the split axis may over-cover L; fully OOB tiles mask
    # to zero, partially OOB tail tiles mask their invalid lanes).
    g = pl.program_id(1) * tiles_per_split + l
    lane = lax.broadcasted_iota(jnp.int32, x_ref.shape, 1)
    valid = (lane + g * tile_l) < length
    xc = jnp.where(valid, x_ref[...] - mu0_ref[...], 0.0)

    xsum_ref[...] += jnp.sum(xc, axis=-1, keepdims=True)

    # x.x^T via VPU broadcast multiplies + XLU lane reduces: the (C_in, C_in)
    # output is far too small for the MXU to be worthwhile.  Column c equals
    # row c by symmetry, so stacking columns reproduces the full matrix.
    c_in = x_ref.shape[0]
    cols = [jnp.sum(xc * xc[c:c + 1, :], axis=-1, keepdims=True)
            for c in range(c_in)]
    xxt_ref[...] += jnp.concatenate(cols, axis=-1)


def _apply_kernel(x_ref, w_ref, shift_ref, o_ref):
    """out = sigmoid(w_eff @ x + shift) for one (batch, L-tile) block, on the VPU."""
    x = x_ref[...]            # (C_in, TL)
    w = w_ref[...]            # (C_out, C_in)
    c_in = x.shape[0]
    # z = sum_c w[:, c] (x) x[c, :]  -- C_in broadcast FMAs filling all sublanes.
    z = w[:, 0:1] * x[0:1, :]
    for c in range(1, c_in):
        z = z + w[:, c:c + 1] * x[c:c + 1, :]
    z = z + shift_ref[...]
    # Sigmoid as a single EUP transcendental (tanh form); exact to f32 ulps.
    o_ref[...] = (0.5 * jnp.tanh(0.5 * z) + 0.5).astype(o_ref.dtype)


def attention_forward(x, w, b, gamma, beta, *, max_lane_tile=_MAX_LANE_TILE):
    """Conv1d(k=1) -> BatchNorm1d (training batch stats, eps=1e-5) -> Sigmoid.

    x: (N, C_in, L) f32; w: (C_out, C_in); b/gamma/beta: (C_out,)
    returns (N, C_out, L) f32
    """
    del b  # conv bias cancels exactly under the BN mean subtraction
    x = x.astype(jnp.float32)
    w = w.astype(jnp.float32)
    gamma = gamma.astype(jnp.float32)
    beta = beta.astype(jnp.float32)

    N, C_in, L = x.shape
    C_out = w.shape[0]

    TL = _choose_lane_tile(L, max_lane_tile)
    n_l = pl.cdiv(L, TL)
    # Extra parallel split of the stats pass when there is no batch parallelism
    # (keeps both v7x TensorCores busy; degenerates to 1 otherwise).
    n_split = 2 if (N == 1 and n_l >= 2) else 1
    tps = pl.cdiv(n_l, n_split)

    # Cheap per-channel mean pre-estimate so second moments accumulate centered
    # (avoids E[y^2] - E[y]^2 cancellation on real data).
    mu0 = jnp.mean(x[0, :, :min(L, 1024)], axis=-1, keepdims=True)  # (C_in, 1)

    cp_stats = pltpu.CompilerParams(
        dimension_semantics=("parallel", "parallel", "arbitrary"),
        vmem_limit_bytes=_VMEM_LIMIT_BYTES)
    cp_apply = pltpu.CompilerParams(
        dimension_semantics=("parallel", "parallel"),
        vmem_limit_bytes=_VMEM_LIMIT_BYTES)

    # ---- Pass 1: streamed per-(batch, split) sufficient statistics of x.
    stats_kernel = functools.partial(
        _stats_kernel, length=L, tile_l=TL, tiles_per_split=tps)
    xxt, xsum = pl.pallas_call(
        stats_kernel,
        grid=(N, n_split, tps),
        in_specs=[
            pl.BlockSpec((C_in, 1), lambda n, s, l: (0, 0)),
            pl.BlockSpec(
                (pl.Squeezed(), C_in, TL),
                # Clamp the block index for fully-OOB tiles of the last split;
                # the in-kernel mask zeroes their contribution anyway.
                lambda n, s, l: (n, 0, jnp.minimum(s * tps + l, n_l - 1))),
        ],
        out_specs=[
            pl.BlockSpec((pl.Squeezed(), pl.Squeezed(), C_in, C_in),
                         lambda n, s, l: (n, s, 0, 0)),
            pl.BlockSpec((pl.Squeezed(), pl.Squeezed(), C_in, 1),
                         lambda n, s, l: (n, s, 0, 0)),
        ],
        out_shape=[
            jax.ShapeDtypeStruct((N, n_split, C_in, C_in), jnp.float32),
            jax.ShapeDtypeStruct((N, n_split, C_in, 1), jnp.float32),
        ],
        compiler_params=cp_stats,
    )(mu0, x)

    # ---- Tiny host math: BN batch stats of y = W x derived analytically, then
    #      Conv + BN folded into one per-channel affine.  HIGHEST precision.
    hi = lax.Precision.HIGHEST
    M = float(N * L)
    Sc = jnp.sum(xxt, axis=(0, 1))                       # (C_in, C_in)  sum (x-mu0)(x-mu0)^T
    sxc = jnp.sum(xsum, axis=(0, 1))[:, 0]               # (C_in,)       sum (x-mu0)
    d = sxc / M                                          # mean_x - mu0
    mean_x = mu0[:, 0] + d                               # (C_in,)
    mean_y = jnp.dot(w, mean_x, precision=hi)            # (C_out,)  E[W x]  (bias cancels)
    wd = jnp.dot(w, d, precision=hi)                     # (C_out,)
    e_cc = jnp.einsum("oc,cd,od->o", w, Sc, w, precision=hi) / M
    var_y = jnp.maximum(e_cc - wd * wd, 0.0)             # centered -> well-conditioned
    scale = gamma * lax.rsqrt(var_y + _BN_EPS)           # (C_out,)
    w_eff = (scale[:, None] * w).astype(jnp.float32)     # (C_out, C_in)
    shift = (beta - scale * mean_y).reshape(C_out, 1).astype(jnp.float32)

    # ---- Pass 2: apply folded Conv+BN + sigmoid, fully data-parallel.
    out = pl.pallas_call(
        _apply_kernel,
        grid=(N, n_l),
        in_specs=[
            pl.BlockSpec((pl.Squeezed(), C_in, TL), lambda n, l: (n, 0, l)),
            pl.BlockSpec((C_out, C_in), lambda n, l: (0, 0)),
            pl.BlockSpec((C_out, 1), lambda n, l: (0, 0)),
        ],
        out_specs=pl.BlockSpec((pl.Squeezed(), C_out, TL), lambda n, l: (n, 0, l)),
        out_shape=jax.ShapeDtypeStruct((N, C_out, L), jnp.float32),
        compiler_params=cp_apply,
    )(x, w_eff, shift)
    return out


def _reference(x, w, b, gamma, beta):
    # Pure-JAX reference of Conv1d(k=1) + BatchNorm1d (train stats) + Sigmoid.
    y = jnp.einsum("oc,ncl->nol", w, x, precision=lax.Precision.HIGHEST)
    y = y + b[None, :, None]
    mean = jnp.mean(y, axis=(0, 2), keepdims=True)
    var = jnp.mean((y - mean) ** 2, axis=(0, 2), keepdims=True)
    y_hat = (y - mean) / jnp.sqrt(var + _BN_EPS)
    z = gamma[None, :, None] * y_hat + beta[None, :, None]
    return jax.nn.sigmoid(z)


def _make_inputs(key, N, C_in, C_out, L, x_offset=0.0):
    k_x, k_w, k_b, k_g, k_be = jax.random.split(key, 5)
    x = jax.random.normal(k_x, (N, C_in, L), dtype=jnp.float32) + x_offset
    w = jax.random.normal(k_w, (C_out, C_in), dtype=jnp.float32) * 0.5
    b = jax.random.normal(k_b, (C_out,), dtype=jnp.float32) * 0.1
    gamma = 1.0 + 0.1 * jax.random.normal(k_g, (C_out,), dtype=jnp.float32)
    beta = 0.1 * jax.random.normal(k_be, (C_out,), dtype=jnp.float32)
    return x, w, b, gamma, beta


if __name__ == "__main__":
    key = jax.random.PRNGKey(0)
    k1, k2 = jax.random.split(key)

    fwd = jax.jit(attention_forward, static_argnames=("max_lane_tile",))

    # Case 1: small canonical shapes (N, C_in, L) = (2, 4, 16).
    N, C_in, C_out, L = 2, 4, 8, 16
    x, w, b, gamma, beta = _make_inputs(k1, N, C_in, C_out, L)
    out = jax.block_until_ready(fwd(x, w, b, gamma, beta,
                                    max_lane_tile=_MAX_LANE_TILE))
    ref = _reference(x, w, b, gamma, beta)
    assert out.shape == (N, C_out, L)
    assert jnp.allclose(out, ref, atol=1e-5, rtol=1e-5), \
        float(jnp.max(jnp.abs(out - ref)))

    # Case 2: N=1 with L not a multiple of the lane tile -> exercises the
    # cdiv grid, the masked tail tile, and the pass-1 parallel split path.
    N2, L2 = 1, 700
    x2, w2, b2, gamma2, beta2 = _make_inputs(k2, N2, C_in, C_out, L2, x_offset=2.0)
    out2 = jax.block_until_ready(fwd(x2, w2, b2, gamma2, beta2,
                                     max_lane_tile=256))
    ref2 = _reference(x2, w2, b2, gamma2, beta2)
    assert out2.shape == (N2, C_out, L2)
    assert jnp.allclose(out2, ref2, atol=1e-5, rtol=1e-5), \
        float(jnp.max(jnp.abs(out2 - ref2)))

    print("KERNEL_OK")
</pallas_src>

<mosaic_0001>
module attributes {stable_mosaic.version = 11 : i64} {
  func.func @_apply_kernel(%arg0: i32, %arg1: i32, %arg2: memref<1x4x16xf32, #tpu.memory_space<vmem>>, %arg3: memref<8x4xf32, #tpu.memory_space<vmem>>, %arg4: memref<8x1xf32, #tpu.memory_space<vmem>>, %arg5: memref<1x8x16xf32, #tpu.memory_space<vmem>>) attributes {dimension_semantics = [#tpu.dimension_semantics<parallel>, #tpu.dimension_semantics<parallel>], iteration_bounds = array<i64: 2, 1>, scalar_prefetch = 0 : i64, scratch_operands = 0 : i64, tpu.core_type = #tpu.core_type<tc>, window_params = [{transform_indices = @transform_0, window_bounds = array<i64: 1, 4, 16>}, {pipeline_mode = #tpu.pipeline_mode<synchronous>, transform_indices = @transform_1, window_bounds = array<i64: 8, 4>}, {pipeline_mode = #tpu.pipeline_mode<synchronous>, transform_indices = @transform_2, window_bounds = array<i64: 8, 1>}, {transform_indices = @transform_3, window_bounds = array<i64: 1, 8, 16>}]} {
    %c0 = arith.constant 0 : index
    %c0_0 = arith.constant 0 : index
    %c0_1 = arith.constant 0 : index
    %0 = vector.load %arg2[%c0, %c0_0, %c0_1] : memref<1x4x16xf32, #tpu.memory_space<vmem>>, vector<1x4x16xf32>
    %1 = vector.shape_cast %0 : vector<1x4x16xf32> to vector<4x16xf32>
    %c0_2 = arith.constant 0 : index
    %c0_3 = arith.constant 0 : index
    %2 = vector.load %arg3[%c0_2, %c0_3] : memref<8x4xf32, #tpu.memory_space<vmem>>, vector<8x4xf32>
    %3 = vector.extract_strided_slice %2 {offsets = [0, 0], sizes = [8, 1], strides = [1, 1]} : vector<8x4xf32> to vector<8x1xf32>
    %4 = vector.extract_strided_slice %1 {offsets = [0, 0], sizes = [1, 16], strides = [1, 1]} : vector<4x16xf32> to vector<1x16xf32>
    %5 = vector.broadcast %3 : vector<8x1xf32> to vector<8x16xf32>
    %6 = vector.broadcast %4 : vector<1x16xf32> to vector<8x16xf32>
    %7 = arith.mulf %5, %6 : vector<8x16xf32>
    %8 = vector.extract_strided_slice %2 {offsets = [0, 1], sizes = [8, 1], strides = [1, 1]} : vector<8x4xf32> to vector<8x1xf32>
    %9 = vector.extract_strided_slice %1 {offsets = [1, 0], sizes = [1, 16], strides = [1, 1]} : vector<4x16xf32> to vector<1x16xf32>
    %10 = vector.broadcast %8 : vector<8x1xf32> to vector<8x16xf32>
    %11 = vector.broadcast %9 : vector<1x16xf32> to vector<8x16xf32>
    %12 = arith.mulf %10, %11 : vector<8x16xf32>
    %13 = arith.addf %7, %12 : vector<8x16xf32>
    %14 = vector.extract_strided_slice %2 {offsets = [0, 2], sizes = [8, 1], strides = [1, 1]} : vector<8x4xf32> to vector<8x1xf32>
    %15 = vector.extract_strided_slice %1 {offsets = [2, 0], sizes = [1, 16], strides = [1, 1]} : vector<4x16xf32> to vector<1x16xf32>
    %16 = vector.broadcast %14 : vector<8x1xf32> to vector<8x16xf32>
    %17 = vector.broadcast %15 : vector<1x16xf32> to vector<8x16xf32>
    %18 = arith.mulf %16, %17 : vector<8x16xf32>
    %19 = arith.addf %13, %18 : vector<8x16xf32>
    %20 = vector.extract_strided_slice %2 {offsets = [0, 3], sizes = [8, 1], strides = [1, 1]} : vector<8x4xf32> to vector<8x1xf32>
    %21 = vector.extract_strided_slice %1 {offsets = [3, 0], sizes = [1, 16], strides = [1, 1]} : vector<4x16xf32> to vector<1x16xf32>
    %22 = vector.broadcast %20 : vector<8x1xf32> to vector<8x16xf32>
    %23 = vector.broadcast %21 : vector<1x16xf32> to vector<8x16xf32>
    %24 = arith.mulf %22, %23 : vector<8x16xf32>
    %25 = arith.addf %19, %24 : vector<8x16xf32>
    %c0_4 = arith.constant 0 : index
    %c0_5 = arith.constant 0 : index
    %26 = vector.load %arg4[%c0_4, %c0_5] : memref<8x1xf32, #tpu.memory_space<vmem>>, vector<8x1xf32>
    %27 = vector.broadcast %26 : vector<8x1xf32> to vector<8x16xf32>
    %28 = arith.addf %25, %27 : vector<8x16xf32>
    %cst = arith.constant 5.000000e-01 : f32
    %29 = vector.broadcast %cst : f32 to vector<8x16xf32>
    %30 = arith.mulf %29, %28 : vector<8x16xf32>
    %31 = math.tanh %30 : vector<8x16xf32>
    %cst_6 = arith.constant 5.000000e-01 : f32
    %32 = vector.broadcast %cst_6 : f32 to vector<8x16xf32>
    %33 = arith.mulf %32, %31 : vector<8x16xf32>
    %cst_7 = arith.constant 5.000000e-01 : f32
    %34 = vector.broadcast %cst_7 : f32 to vector<8x16xf32>
    %35 = arith.addf %33, %34 : vector<8x16xf32>
    %c0_8 = arith.constant 0 : index
    %c0_9 = arith.constant 0 : index
    %c0_10 = arith.constant 0 : index
    %36 = vector.load %arg5[%c0_8, %c0_9, %c0_10] : memref<1x8x16xf32, #tpu.memory_space<vmem>>, vector<1x8x16xf32>
    %37 = vector.shape_cast %36 : vector<1x8x16xf32> to vector<8x16xf32>
    %38 = vector.shape_cast %35 : vector<8x16xf32> to vector<1x8x16xf32>
    tpu.vector_store %arg5[%c0_8, %c0_9, %c0_10], %38 {strides = array<i32>} : memref<1x8x16xf32, #tpu.memory_space<vmem>>, vector<1x8x16xf32>,
    return
  }
  func.func @transform_0(%arg0: i32, %arg1: i32) -> (i32, i32, i32) {
    %c0_i32 = arith.constant 0 : i32
    %c0_i32_0 = arith.constant 0 : i32
    return %arg0, %c0_i32, %arg1 : i32, i32, i32
  }
  func.func @transform_1(%arg0: i32, %arg1: i32) -> (i32, i32) {
    %c0_i32 = arith.constant 0 : i32
    %c0_i32_0 = arith.constant 0 : i32
    %c0_i32_1 = arith.constant 0 : i32
    return %c0_i32, %c0_i32_0 : i32, i32
  }
  func.func @transform_2(%arg0: i32, %arg1: i32) -> (i32, i32) {
    %c0_i32 = arith.constant 0 : i32
    %c0_i32_0 = arith.constant 0 : i32
    %c0_i32_1 = arith.constant 0 : i32
    return %c0_i32, %c0_i32_0 : i32, i32
  }
  func.func @transform_3(%arg0: i32, %arg1: i32) -> (i32, i32, i32) {
    %c0_i32 = arith.constant 0 : i32
    %c0_i32_0 = arith.constant 0 : i32
    return %arg0, %c0_i32, %arg1 : i32, i32, i32
  }
}

module attributes {stable_mosaic.version = 11 : i64} {
  func.func @_stats_kernel(%arg0: i32, %arg1: i32, %arg2: i32, %arg3: memref<4x1xf32, #tpu.memory_space<vmem>>, %arg4: memref<1x4x16xf32, #tpu.memory_space<vmem>>, %arg5: memref<1x1x4x4xf32, #tpu.memory_space<vmem>>, %arg6: memref<1x1x4x1xf32, #tpu.memory_space<vmem>>) attributes {dimension_semantics = [#tpu.dimension_semantics<parallel>, #tpu.dimension_semantics<parallel>, #tpu.dimension_semantics<arbitrary>], iteration_bounds = array<i64: 2, 1, 1>, scalar_prefetch = 0 : i64, scratch_operands = 0 : i64, tpu.core_type = #tpu.core_type<tc>, window_params = [{pipeline_mode = #tpu.pipeline_mode<synchronous>, transform_indices = @transform_0, window_bounds = array<i64: 4, 1>}, {transform_indices = @transform_1, window_bounds = array<i64: 1, 4, 16>}, {transform_indices = @transform_2, window_bounds = array<i64: 1, 1, 4, 4>}, {transform_indices = @transform_3, window_bounds = array<i64: 1, 1, 4, 1>}]} {
    %c0_i32 = arith.constant 0 : i32
    %0 = arith.cmpi eq, %arg2, %c0_i32 : i32
    %1 = arith.extui %0 : i1 to i32
    %c0_i32_0 = arith.constant 0 : i32
    %2 = arith.cmpi ne, %1, %c0_i32_0 : i32
    scf.if %2 {
      %cst_27 = arith.constant 0.000000e+00 : f32
      %53 = vector.broadcast %cst_27 : f32 to vector<4x4xf32>
      %c0_28 = arith.constant 0 : index
      %c0_29 = arith.constant 0 : index
      %c0_30 = arith.constant 0 : index
      %c0_31 = arith.constant 0 : index
      %54 = vector.load %arg5[%c0_28, %c0_29, %c0_30, %c0_31] : memref<1x1x4x4xf32, #tpu.memory_space<vmem>>, vector<1x1x4x4xf32>
      %55 = vector.shape_cast %54 : vector<1x1x4x4xf32> to vector<4x4xf32>
      %56 = vector.shape_cast %53 : vector<4x4xf32> to vector<1x1x4x4xf32>
      tpu.vector_store %arg5[%c0_28, %c0_29, %c0_30, %c0_31], %56 {strides = array<i32>} : memref<1x1x4x4xf32, #tpu.memory_space<vmem>>, vector<1x1x4x4xf32>,
      %cst_32 = arith.constant 0.000000e+00 : f32
      %57 = vector.broadcast %cst_32 : f32 to vector<4x1xf32>
      %c0_33 = arith.constant 0 : index
      %c0_34 = arith.constant 0 : index
      %c0_35 = arith.constant 0 : index
      %c0_36 = arith.constant 0 : index
      %58 = vector.load %arg6[%c0_33, %c0_34, %c0_35, %c0_36] : memref<1x1x4x1xf32, #tpu.memory_space<vmem>>, vector<1x1x4x1xf32>
      %59 = vector.shape_cast %58 : vector<1x1x4x1xf32> to vector<4x1xf32>
      %60 = vector.shape_cast %57 : vector<4x1xf32> to vector<1x1x4x1xf32>
      tpu.vector_store %arg6[%c0_33, %c0_34, %c0_35, %c0_36], %60 {strides = array<i32>} : memref<1x1x4x1xf32, #tpu.memory_space<vmem>>, vector<1x1x4x1xf32>,
    } else {
    }
    %c1_i32 = arith.constant 1 : i32
    %3 = arith.muli %arg1, %c1_i32 : i32
    %4 = arith.addi %3, %arg2 : i32
    %5 = tpu.iota {dimensions = array<i32: 1>} : vector<4x16xi32>
    %c16_i32 = arith.constant 16 : i32
    %6 = arith.muli %4, %c16_i32 : i32
    %7 = vector.broadcast %6 : i32 to vector<4x16xi32>
    %8 = arith.addi %5, %7 : vector<4x16xi32>
    %c16_i32_1 = arith.constant 16 : i32
    %9 = vector.broadcast %c16_i32_1 : i32 to vector<4x16xi32>
    %10 = arith.cmpi slt, %8, %9 : vector<4x16xi32>
    %c0 = arith.constant 0 : index
    %c0_2 = arith.constant 0 : index
    %c0_3 = arith.constant 0 : index
    %11 = vector.load %arg4[%c0, %c0_2, %c0_3] : memref<1x4x16xf32, #tpu.memory_space<vmem>>, vector<1x4x16xf32>
    %12 = vector.shape_cast %11 : vector<1x4x16xf32> to vector<4x16xf32>
    %c0_4 = arith.constant 0 : index
    %c0_5 = arith.constant 0 : index
    %13 = vector.load %arg3[%c0_4, %c0_5] : memref<4x1xf32, #tpu.memory_space<vmem>>, vector<4x1xf32>
    %14 = vector.broadcast %13 : vector<4x1xf32> to vector<4x16xf32>
    %15 = arith.subf %12, %14 : vector<4x16xf32>
    %cst = arith.constant 0.000000e+00 : f32
    %16 = vector.broadcast %cst : f32 to vector<4x16xf32>
    %17 = arith.select %10, %15, %16 : vector<4x16xi1>, vector<4x16xf32>
    %c0_6 = arith.constant 0 : index
    %c0_7 = arith.constant 0 : index
    %c0_8 = arith.constant 0 : index
    %c0_9 = arith.constant 0 : index
    %18 = vector.load %arg6[%c0_6, %c0_7, %c0_8, %c0_9] : memref<1x1x4x1xf32, #tpu.memory_space<vmem>>, vector<1x1x4x1xf32>
    %19 = vector.shape_cast %18 : vector<1x1x4x1xf32> to vector<4x1xf32>
    %cst_10 = arith.constant dense<0.000000e+00> : vector<4xf32>
    %20 = vector.multi_reduction <add>, %17, %cst_10 [1] : vector<4x16xf32> to vector<4xf32>
    %21 = vector.shape_cast %20 : vector<4xf32> to vector<4x1xf32>
    %22 = arith.addf %19, %21 : vector<4x1xf32>
    %c0_11 = arith.constant 0 : index
    %c0_12 = arith.constant 0 : index
    %c0_13 = arith.constant 0 : index
    %c0_14 = arith.constant 0 : index
    %23 = vector.load %arg6[%c0_11, %c0_12, %c0_13, %c0_14] : memref<1x1x4x1xf32, #tpu.memory_space<vmem>>, vector<1x1x4x1xf32>
    %24 = vector.shape_cast %23 : vector<1x1x4x1xf32> to vector<4x1xf32>
    %25 = vector.shape_cast %22 : vector<4x1xf32> to vector<1x1x4x1xf32>
    tpu.vector_store %arg6[%c0_11, %c0_12, %c0_13, %c0_14], %25 {strides = array<i32>} : memref<1x1x4x1xf32, #tpu.memory_space<vmem>>, vector<1x1x4x1xf32>,
    %26 = vector.extract_strided_slice %17 {offsets = [0, 0], sizes = [1, 16], strides = [1, 1]} : vector<4x16xf32> to vector<1x16xf32>
    %27 = vector.broadcast %26 : vector<1x16xf32> to vector<4x16xf32>
    %28 = arith.mulf %17, %27 : vector<4x16xf32>
    %cst_15 = arith.constant dense<0.000000e+00> : vector<4xf32>
    %29 = vector.multi_reduction <add>, %28, %cst_15 [1] : vector<4x16xf32> to vector<4xf32>
    %30 = vector.shape_cast %29 : vector<4xf32> to vector<4x1xf32>
    %31 = vector.extract_strided_slice %17 {offsets = [1, 0], sizes = [1, 16], strides = [1, 1]} : vector<4x16xf32> to vector<1x16xf32>
    %32 = vector.broadcast %31 : vector<1x16xf32> to vector<4x16xf32>
    %33 = arith.mulf %17, %32 : vector<4x16xf32>
    %cst_16 = arith.constant dense<0.000000e+00> : vector<4xf32>
    %34 = vector.multi_reduction <add>, %33, %cst_16 [1] : vector<4x16xf32> to vector<4xf32>
    %35 = vector.shape_cast %34 : vector<4xf32> to vector<4x1xf32>
    %36 = vector.extract_strided_slice %17 {offsets = [2, 0], sizes = [1, 16], strides = [1, 1]} : vector<4x16xf32> to vector<1x16xf32>
    %37 = vector.broadcast %36 : vector<1x16xf32> to vector<4x16xf32>
    %38 = arith.mulf %17, %37 : vector<4x16xf32>
    %cst_17 = arith.constant dense<0.000000e+00> : vector<4xf32>
    %39 = vector.multi_reduction <add>, %38, %cst_17 [1] : vector<4x16xf32> to vector<4xf32>
    %40 = vector.shape_cast %39 : vector<4xf32> to vector<4x1xf32>
    %41 = vector.extract_strided_slice %17 {offsets = [3, 0], sizes = [1, 16], strides = [1, 1]} : vector<4x16xf32> to vector<1x16xf32>
    %42 = vector.broadcast %41 : vector<1x16xf32> to vector<4x16xf32>
    %43 = arith.mulf %17, %42 : vector<4x16xf32>
    %cst_18 = arith.constant dense<0.000000e+00> : vector<4xf32>
    %44 = vector.multi_reduction <add>, %43, %cst_18 [1] : vector<4x16xf32> to vector<4xf32>
    %45 = vector.shape_cast %44 : vector<4xf32> to vector<4x1xf32>
    %c0_19 = arith.constant 0 : index
    %c0_20 = arith.constant 0 : index
    %c0_21 = arith.constant 0 : index
    %c0_22 = arith.constant 0 : index
    %46 = vector.load %arg5[%c0_19, %c0_20, %c0_21, %c0_22] : memref<1x1x4x4xf32, #tpu.memory_space<vmem>>, vector<1x1x4x4xf32>
    %47 = vector.shape_cast %46 : vector<1x1x4x4xf32> to vector<4x4xf32>
    %48 = tpu.concatenate %30, %35, %40, %45 in 1 : vector<4x1xf32>, vector<4x1xf32>, vector<4x1xf32>, vector<4x1xf32> -> vector<4x4xf32>
    %49 = arith.addf %47, %48 : vector<4x4xf32>
    %c0_23 = arith.constant 0 : index
    %c0_24 = arith.constant 0 : index
    %c0_25 = arith.constant 0 : index
    %c0_26 = arith.constant 0 : index
    %50 = vector.load %arg5[%c0_23, %c0_24, %c0_25, %c0_26] : memref<1x1x4x4xf32, #tpu.memory_space<vmem>>, vector<1x1x4x4xf32>
    %51 = vector.shape_cast %50 : vector<1x1x4x4xf32> to vector<4x4xf32>
    %52 = vector.shape_cast %49 : vector<4x4xf32> to vector<1x1x4x4xf32>
    tpu.vector_store %arg5[%c0_23, %c0_24, %c0_25, %c0_26], %52 {strides = array<i32>} : memref<1x1x4x4xf32, #tpu.memory_space<vmem>>, vector<1x1x4x4xf32>,
    return
  }
  func.func @transform_0(%arg0: i32, %arg1: i32, %arg2: i32) -> (i32, i32) {
    %c0_i32 = arith.constant 0 : i32
    %c0_i32_0 = arith.constant 0 : i32
    %c0_i32_1 = arith.constant 0 : i32
    return %c0_i32, %c0_i32_0 : i32, i32
  }
  func.func @transform_1(%arg0: i32, %arg1: i32, %arg2: i32) -> (i32, i32, i32) {
    %c1_i32 = arith.constant 1 : i32
    %0 = arith.muli %arg1, %c1_i32 : i32
    %1 = arith.addi %0, %arg2 : i32
    %c0_i32 = arith.constant 0 : i32
    %2 = arith.minsi %1, %c0_i32 : i32
    %c0_i32_0 = arith.constant 0 : i32
    %c0_i32_1 = arith.constant 0 : i32
    return %arg0, %c0_i32_0, %2 : i32, i32, i32
  }
  func.func @transform_2(%arg0: i32, %arg1: i32, %arg2: i32) -> (i32, i32, i32, i32) {
    %c0_i32 = arith.constant 0 : i32
    %c0_i32_0 = arith.constant 0 : i32
    %c0_i32_1 = arith.constant 0 : i32
    return %arg0, %arg1, %c0_i32, %c0_i32_0 : i32, i32, i32, i32
  }
  func.func @transform_3(%arg0: i32, %arg1: i32, %arg2: i32) -> (i32, i32, i32, i32) {
    %c0_i32 = arith.constant 0 : i32
    %c0_i32_0 = arith.constant 0 : i32
    %c0_i32_1 = arith.constant 0 : i32
    return %arg0, %arg1, %c0_i32, %c0_i32_0 : i32, i32, i32, i32
  }
}

</mosaic_0001>

<llo_original>
// kernel: attention_forward.2
$region0: #{attention_forward.2}
  #allocation0 [shape = 'u32[]', space=smem, size = 0x4, offset = 0x4, fixed_abs, tag = 'smem constant byte address 0x4 - core index']
  #allocation1 [shape = 'u32[72,128]{1,0:T(1,128)}', space=vmem, size = 0x9000, scoped, tag = 'internal scratch']
  %s0 = inlined_call_operand.vmem [shape: f32[4,1], index: 0, kind: input, shape index: {}]
  %s1 = inlined_call_operand.vmem [shape: f32[2,4,16], index: 1, kind: input, shape index: {}]
  %s2 = inlined_call_operand.vmem [shape: f32[2,1,4,4], index: 2, kind: output, shape index: {0}]
  %s3 = inlined_call_operand.vmem [shape: f32[2,1,4,1], index: 3, kind: output, shape index: {1}]
  %4 = xla_tuple %s2, %s3
  %s5 = sld [smem:[#allocation0]]
  $region53: #{attention_forward.2} parent=0
    _
  %s7 = ssub.s32 1, %s5
  %s8 = scalar_select 0, %s7, %s5
  loop: start=0, step=1, limit=4
  $region2: #{attention_forward.2} parent=0 // loop_pre_header
    _
  $region3: #{attention_forward.2} parent=0 // loop_header
    %s10 = sphi 0, %s14
    %p11 = scmp.ge.s32.totalorder %s10, 4
    %s17 = sphi 0, %s36
    %s18 = sphi 0, %s32
    %s19 = sphi 0, %s28
    %s20 = sphi 0, %s17
    %s21 = sphi 0, %s18
    %s22 = sphi 0, %s19
    %s23 = sphi 0, %s20
    %s24 = sphi 0, %s21
    %s25 = sphi 0, %s22
    %s37 = sphi 0, %s37
    %s39 = sphi 0, %s37
    %s40 = sphi 0, %s39
    %s54 = sphi 0, %s40
    %s68 = sphi 0, %s70
    %s71 = sphi 0, %s68
    %s72 = sphi 0, %s71
    %s88 = sphi 0, %s72
    %s96 = sphi 0, %s98
    %s99 = sphi 0, %s96
    %s100 = sphi 0, %s99
    %s116 = sphi 0, %s100
    %s124 = sphi 0, %s126
    %s127 = sphi 0, %s124
    %s128 = sphi 0, %s127
    %s144 = sphi 0, %s128
  $region4: #{attention_forward.2} parent=0 // loop_header_branch
    %13 = sbr.rel (%p11) target = $region8
  $region5: #{attention_forward.2} parent=0 // loop_body
    %s15 = ssub.s32 %s10, 1
    %s16 = ssub.s32 %s10, 2
    %s26 = sadd.s32 1, %s19
    %p27 = scmp.ge.s32.totalorder %s26, 1
    %s28 = scalar_select %p27, 0, %s26
    %s29 = sadd.s32 1, %s18
    %s30 = scalar_select %p27, %s29, %s18
    %p31 = scmp.ge.s32.totalorder %s30, 1
    %s32 = scalar_select %p31, 0, %s30
    %s33 = sadd.s32 1, %s17
    %s34 = scalar_select %p31, %s33, %s17
    %p35 = scmp.ge.s32.totalorder %s34, 2
    %s36 = scalar_select %p35, 0, %s34
    %s38 = sadd.s32 %s37, 1
    %p41 = scmp.eq.s32.totalorder %s10, 1
    %p42 = scmp.ne.s32.totalorder %s37, %s39
    %p43 = scmp.eq.s32.totalorder %s10, 0
    %p44 = por %p42, %p43
    %p45 = scmp.ne.s32.totalorder %s37, %s39
    %p46 = scmp.eq.s32.totalorder %s15, 1
    %p47 = por %p45, %p46
    %p48 = scmp.ne.s32.totalorder %s39, %s40
    %p49 = scmp.eq.s32.totalorder %s15, 0
    %p50 = por %p48, %p49
    %p51 = scmp.ne.s32.totalorder %s39, %s40
    %p52 = scmp.eq.s32.totalorder %s16, 1
    %p53 = por %p51, %p52
    %p55 = scmp.ne.s32.totalorder %s40, %s54
    %p56 = scmp.eq.s32.totalorder %s16, 0
    %p57 = por %p55, %p56
    %s58 = sadd.s32 %s18, %s19
    %p59 = scmp.lt.s32.totalorder %s58, 0
    %s60 = scalar_select %p59, %s58, 0
    %s61 = sadd.s32 %s32, %s28
    %p62 = scmp.lt.s32.totalorder %s61, 0
    %s63 = scalar_select %p62, %s61, 0
    %s64 = ssub.s32 %s17, %s36
    %s65 = ssub.s32 %s60, %s63
    %s66 = sor.u32 %s64, %s65
    %p67 = scmp.eq.s32.totalorder %s66, 0
    %s69 = sadd.s32 %s68, 1
    %s70 = scalar_select %p67, %s68, %s69
    %p73 = pneg %p67
    %p74 = scmp.eq.s32.totalorder %s10, 1
    %p75 = por %p73, %p74
    %p76 = scmp.ne.s32.totalorder %s68, %s71
    %p77 = scmp.eq.s32.totalorder %s10, 0
    %p78 = por %p76, %p77
    %p79 = scmp.ne.s32.totalorder %s68, %s71
    %p80 = scmp.eq.s32.totalorder %s15, 1
    %p81 = por %p79, %p80
    %p82 = scmp.ne.s32.totalorder %s71, %s72
    %p83 = scmp.eq.s32.totalorder %s15, 0
    %p84 = por %p82, %p83
    %p85 = scmp.ne.s32.totalorder %s71, %s72
    %p86 = scmp.eq.s32.totalorder %s16, 1
    %p87 = por %p85, %p86
    %p89 = scmp.ne.s32.totalorder %s72, %s88
    %p90 = scmp.eq.s32.totalorder %s16, 0
    %p91 = por %p89, %p90
    %s92 = ssub.s32 %s17, %s36
    %s93 = ssub.s32 %s18, %s32
    %s94 = sor.u32 %s92, %s93
    %p95 = scmp.eq.s32.totalorder %s94, 0
    %s97 = sadd.s32 %s96, 1
    %s98 = scalar_select %p95, %s96, %s97
    %p101 = pneg %p95
    %p102 = scmp.eq.s32.totalorder %s10, 1
    %p103 = por %p101, %p102
    %p104 = scmp.ne.s32.totalorder %s96, %s99
    %p105 = scmp.eq.s32.totalorder %s10, 0
    %p106 = por %p104, %p105
    %p107 = scmp.ne.s32.totalorder %s96, %s99
    %p108 = scmp.eq.s32.totalorder %s15, 1
    %p109 = por %p107, %p108
    %p110 = scmp.ne.s32.totalorder %s99, %s100
    %p111 = scmp.eq.s32.totalorder %s15, 0
    %p112 = por %p110, %p111
    %p113 = scmp.ne.s32.totalorder %s99, %s100
    %p114 = scmp.eq.s32.totalorder %s16, 1
    %p115 = por %p113, %p114
    %p117 = scmp.ne.s32.totalorder %s100, %s116
    %p118 = scmp.eq.s32.totalorder %s16, 0
    %p119 = por %p117, %p118
    %s120 = ssub.s32 %s17, %s36
    %s121 = ssub.s32 %s18, %s32
    %s122 = sor.u32 %s120, %s121
    %p123 = scmp.eq.s32.totalorder %s122, 0
    %s125 = sadd.s32 %s124, 1
    %s126 = scalar_select %p123, %s124, %s125
    %p129 = pneg %p123
    %p130 = scmp.eq.s32.totalorder %s10, 1
    %p131 = por %p129, %p130
    %p132 = scmp.ne.s32.totalorder %s124, %s127
    %p133 = scmp.eq.s32.totalorder %s10, 0
    %p134 = por %p132, %p133
    %p135 = scmp.ne.s32.totalorder %s124, %s127
    %p136 = scmp.eq.s32.totalorder %s15, 1
    %p137 = por %p135, %p136
    %p138 = scmp.ne.s32.totalorder %s127, %s128
    %p139 = scmp.eq.s32.totalorder %s15, 0
    %p140 = por %p138, %p139
    %p141 = scmp.ne.s32.totalorder %s127, %s128
    %p142 = scmp.eq.s32.totalorder %s16, 1
    %p143 = por %p141, %p142
    %p145 = scmp.ne.s32.totalorder %s128, %s144
    %p146 = scmp.eq.s32.totalorder %s16, 0
    %p147 = por %p145, %p146
    %p148 = scmp.le.s32.totalorder 1, %s10
    %p149 = scmp.lt.s32.totalorder %s10, 3
    %p150 = pnand %p148, %p149
    %p151 = pneg %p150
    // Predicated region
    $region9: #{attention_forward.2} parent=5 // pred_check
      _
    $region10: #{attention_forward.2} parent=5 // pred_check_branch
      %153 = sbr.rel (%p150) target = $region12
    $region11: #{attention_forward.2} parent=5 // pred_region
      %s154 = ssub.s32 %s10, 1
      // Predicated region
      $region13: #{attention_forward.2} parent=11 // pred_check
        %p155 = pneg %p50
      $region14: #{attention_forward.2} parent=11 // pred_check_branch
        %157 = sbr.rel (%p155) target = $region16
      $region15: #{attention_forward.2} parent=11 // pred_region
        _
      $region16: #{attention_forward.2} parent=11 // pred_fallthru
        _
    $region12: #{attention_forward.2} parent=5 // pred_fallthru
      _
    %p158 = scmp.lt.s32.totalorder %s10, 2
    // Predicated region
    $region17: #{attention_forward.2} parent=5 // pred_check
      %p159 = pneg %p158
    $region18: #{attention_forward.2} parent=5 // pred_check_branch
      %161 = sbr.rel (%p159) target = $region20
    $region19: #{attention_forward.2} parent=5 // pred_region
      // Predicated region
      $region21: #{attention_forward.2} parent=19 // pred_check
        %p162 = pneg %p78
      $region22: #{attention_forward.2} parent=19 // pred_check_branch
        %164 = sbr.rel (%p162) target = $region24
      $region23: #{attention_forward.2} parent=19 // pred_region
        %s165 = sadd.s32 %s18, %s19
        %p166 = scmp.lt.s32.totalorder %s165, 0
        %s167 = scalar_select %p166, %s165, 0
        %p168 = scmp.lt.s32.totalorder %s17, 1
        %s169 = scalar_select %p168, %s17, 1
        %p170 = scmp.lt.s32.totalorder %s167, 0
        %s171 = scalar_select %p170, %s167, 0
        %s172 = sadd.s32 %s171, %s169
        %s173 = smul.addr %s172, 4
        %s174 = scalar_lea.vmem %s1, %s173
        %s175 = sadd.s32 %s18, %s19
        %p176 = scmp.lt.s32.totalorder %s175, 0
        %s177 = scalar_select %p176, %s175, 0
      $region24: #{attention_forward.2} parent=19 // pred_fallthru
        _
    $region20: #{attention_forward.2} parent=5 // pred_fallthru
      _
    %p178 = scmp.le.s32.totalorder 1, %s10
    %p179 = scmp.lt.s32.totalorder %s10, 3
    %p180 = pnand %p178, %p179
    %p181 = pneg %p180
    // Predicated region
    $region25: #{attention_forward.2} parent=5 // pred_check
      _
    $region26: #{attention_forward.2} parent=5 // pred_check_branch
      %183 = sbr.rel (%p180) target = $region28
    $region27: #{attention_forward.2} parent=5 // pred_region
      %s184 = ssub.s32 %s10, 1
      %p185 = pneg %p50
      %p186 = pneg %p47
      %s187 = sadd.s32 %s21, %s22
      %p188 = scmp.lt.s32.totalorder %s187, 0
      %s189 = scalar_select %p188, %s187, 0
      %p190 = scmp.lt.s32.totalorder %s20, 1
      %s191 = scalar_select %p190, %s20, 1
      %p192 = scmp.lt.s32.totalorder %s189, 0
      %s193 = scalar_select %p192, %s189, 0
      %s194 = sadd.s32 %s193, %s191
      %s195 = smul.addr %s194, 4
      %s196 = scalar_lea.vmem %s1, %s195
      %p197 = pneg %p84
      %p198 = pneg %p81
      %p199 = pneg %p112
      %p200 = pneg %p109
      %p201 = scmp.lt.s32.totalorder %s20, 1
      %s202 = scalar_select %p201, %s20, 1
      %p203 = scmp.lt.s32.totalorder %s21, 0
      %s204 = scalar_select %p203, %s21, 0
      %s205 = sadd.s32 %s204, %s202
      %s206 = smul.addr %s205, 4
      %s207 = scalar_lea.vmem %s2, %s206
      %p208 = pneg %p140
      %p209 = pneg %p137
      %p210 = scmp.lt.s32.totalorder %s20, 1
      %s211 = scalar_select %p210, %s20, 1
      %p212 = scmp.lt.s32.totalorder %s21, 0
      %s213 = scalar_select %p212, %s21, 0
      %s214 = sadd.s32 %s213, %s211
      %s215 = smul.addr %s214, 4
      %s216 = scalar_lea.vmem %s3, %s215
      %s217 = sadd.s32 %s21, %s22
      %p218 = scmp.lt.s32.totalorder %s217, 0
      %s219 = scalar_select %p218, %s217, 0
      %p220 = scmp.lt.s32.totalorder %s20, 1
      %s221 = scalar_select %p220, %s20, 1
      %p222 = scmp.lt.s32.totalorder %s219, 0
      %s223 = scalar_select %p222, %s219, 0
      %s224 = sadd.s32 %s223, %s221
      %s225 = smul.addr %s224, 4
      %s226 = scalar_lea.vmem %s1, %s225
      %s227 = sadd.s32 %s21, %s22
      %p228 = scmp.lt.s32.totalorder %s227, 0
      %s229 = scalar_select %p228, %s227, 0
      %p230 = scmp.lt.s32.totalorder %s20, 1
      %s231 = scalar_select %p230, %s20, 1
      %p232 = scmp.lt.s32.totalorder %s21, 0
      %s233 = scalar_select %p232, %s21, 0
      %s234 = sadd.s32 %s233, %s231
      %s235 = smul.addr %s234, 4
      %s236 = scalar_lea.vmem %s2, %s235
      %p237 = scmp.lt.s32.totalorder %s20, 1
      %s238 = scalar_select %p237, %s20, 1
      %p239 = scmp.lt.s32.totalorder %s21, 0
      %s240 = scalar_select %p239, %s21, 0
      %s241 = sadd.s32 %s240, %s238
      %s242 = smul.addr %s241, 4
      %s243 = scalar_lea.vmem %s3, %s242
      %p244 = scmp.eq.s32.totalorder %s22, 0
      // Predicated region
      $region29: #{attention_forward.2} parent=27 // pred_check
        %p245 = pneg %p244
      $region30: #{attention_forward.2} parent=27 // pred_check_branch
        %247 = sbr.rel (%p245) target = $region32
      $region31: #{attention_forward.2} parent=27 // pred_region
        %vm248 = vcmask 27648
        %249 = vst.msk [vmem:[%s236] sm:$0xf] %vm248, 0.0
        %vm250 = vcmask 3072
        %251 = vst.msk [vmem:[%s243] sm:$0xf] %vm250, 0.0
      $region32: #{attention_forward.2} parent=27 // pred_fallthru
        _
      %s252 = sadd.s32 %s21, %s22
      %v253 = vlaneseq
      %v254 = vand.u32 %v253, 127
      %s255 = smul.u32 %s252, 16
      %v256 = vstv %s255
      %v257 = vadd.s32 %v254, %v256
      %vm258 = vcmp.lt.s32.totalorder %v257, 16
      %v259 = vld [vmem:[%s226] sm:$0xf]
      %v260 = vld [vmem:[%s0] sm:$0xf]
      %262 = vset.pattern.permute.xlu0 0
      %263 = vperm.xlu0 %262, %v260
      %v264 = vpop.permute.xlu0 %263
      %v266 = vsub.f32 %v259, %v264
      %v267 = vsel %vm258, %v266, 0.0
      %v268 = vld [vmem:[%s243] sm:$0xf]
      %vm269 = vcmask 125952
      %v270 = vsel %vm269, %v267, 0.0
      %271 = vadd.xlane.f32.xlu0 %v270
      %v272 = vpop.xlane.xlu0 %271
      %v273 = vadd.f32 %v268, %v272
      %vm274 = vcmask 3072
      %275 = vst.msk [vmem:[%s243] sm:$0xf] %vm274, %v273
      %v276 = vperm.slane %v267, 0
      %v277 = vmul.f32 %v267, %v276
      %v278 = vsel %vm269, %v277, 0.0
      %279 = vadd.xlane.f32.xlu0 %v278
      %v280 = vpop.xlane.xlu0 %279
      %v281 = vperm.slane %v267, 1
      %v282 = vmul.f32 %v267, %v281
      %v283 = vsel %vm269, %v282, 0.0
      %284 = vadd.xlane.f32.xlu0 %v283
      %v285 = vpop.xlane.xlu0 %284
      %v286 = vperm.slane %v267, 2
      %v287 = vmul.f32 %v267, %v286
      %v288 = vsel %vm269, %v287, 0.0
      %289 = vadd.xlane.f32.xlu0 %v288
      %v290 = vpop.xlane.xlu0 %289
      %v291 = vperm.slane %v267, 3
      %v292 = vmul.f32 %v267, %v291
      %v293 = vsel %vm269, %v292, 0.0
      %294 = vadd.xlane.f32.xlu0 %v293
      %v295 = vpop.xlane.xlu0 %294
      %v296 = vld [vmem:[%s236] sm:$0xf]
      %vm297 = vcmask 7168
      %v298 = vsel %vm297, %v280, %v285
      %vm299 = vcmask 15360
      %v300 = vsel %vm299, %v298, %v290
      %vm301 = vcmask 23552
      %v302 = vsel %vm301, %v300, %v295
      %v303 = vadd.f32 %v296, %v302
      %vm304 = vcmask 27648
      %305 = vst.msk [vmem:[%s236] sm:$0xf] %vm304, %v303
      %p306 = scmp.lt.s32.totalorder %s20, 1
      %s307 = scalar_select %p306, %s20, 1
      %p308 = scmp.lt.s32.totalorder %s21, 0
      %s309 = scalar_select %p308, %s21, 0
      %s310 = sadd.s32 %s309, %s307
      %s311 = smul.addr %s310, 4
      %s312 = scalar_lea.vmem %s2, %s311
      %p313 = scmp.lt.s32.totalorder %s20, 1
      %s314 = scalar_select %p313, %s20, 1
      %p315 = scmp.lt.s32.totalorder %s21, 0
      %s316 = scalar_select %p315, %s21, 0
      %s317 = sadd.s32 %s316, %s314
      %s318 = smul.addr %s317, 4
      %s319 = scalar_lea.vmem %s3, %s318
      // Predicated region
      $region33: #{attention_forward.2} parent=27 // pred_check
        %p320 = pneg %p109
      $region34: #{attention_forward.2} parent=27 // pred_check_branch
        %322 = sbr.rel (%p320) target = $region36
      $region35: #{attention_forward.2} parent=27 // pred_region
        _
      $region36: #{attention_forward.2} parent=27 // pred_fallthru
        _
      // Predicated region
      $region37: #{attention_forward.2} parent=27 // pred_check
        %p323 = pneg %p137
      $region38: #{attention_forward.2} parent=27 // pred_check_branch
        %325 = sbr.rel (%p323) target = $region40
      $region39: #{attention_forward.2} parent=27 // pred_region
        _
      $region40: #{attention_forward.2} parent=27 // pred_fallthru
        _
    $region28: #{attention_forward.2} parent=5 // pred_fallthru
      _
    %p326 = scmp.le.s32.totalorder 2, %s10
    // Predicated region
    $region41: #{attention_forward.2} parent=5 // pred_check
      %p327 = pneg %p326
    $region42: #{attention_forward.2} parent=5 // pred_check_branch
      %329 = sbr.rel (%p327) target = $region44
    $region43: #{attention_forward.2} parent=5 // pred_region
      %s330 = ssub.s32 %s10, 2
      // Predicated region
      $region45: #{attention_forward.2} parent=43 // pred_check
        %p331 = pneg %p115
      $region46: #{attention_forward.2} parent=43 // pred_check_branch
        %333 = sbr.rel (%p331) target = $region48
      $region47: #{attention_forward.2} parent=43 // pred_region
        %p334 = scmp.lt.s32.totalorder %s23, 1
        %s335 = scalar_select %p334, %s23, 1
        %p336 = scmp.lt.s32.totalorder %s24, 0
        %s337 = scalar_select %p336, %s24, 0
        %s338 = sadd.s32 %s337, %s335
        %s339 = smul.addr %s338, 4
        %s340 = scalar_lea.vmem %s2, %s339
      $region48: #{attention_forward.2} parent=43 // pred_fallthru
        _
      // Predicated region
      $region49: #{attention_forward.2} parent=43 // pred_check
        %p341 = pneg %p143
      $region50: #{attention_forward.2} parent=43 // pred_check_branch
        %343 = sbr.rel (%p341) target = $region52
      $region51: #{attention_forward.2} parent=43 // pred_region
        %p344 = scmp.lt.s32.totalorder %s23, 1
        %s345 = scalar_select %p344, %s23, 1
        %p346 = scmp.lt.s32.totalorder %s24, 0
        %s347 = scalar_select %p346, %s24, 0
        %s348 = sadd.s32 %s347, %s345
        %s349 = smul.addr %s348, 4
        %s350 = scalar_lea.vmem %s3, %s349
      $region52: #{attention_forward.2} parent=43 // pred_fallthru
        _
    $region44: #{attention_forward.2} parent=5 // pred_fallthru
      _
  $region6: #{attention_forward.2} parent=0 // loop_footer
    %s14 = sadd.s32 1, %s10
  $region7: #{attention_forward.2} parent=0 // loop_footer_branch
    %9 = sbr.rel target = $region3
  $region8: #{attention_forward.2} parent=0 // loop_exit
    _

// kernel: attention_forward.3
$region0: #{attention_forward.3}
  #allocation0 [shape = 'u32[]', space=smem, size = 0x4, offset = 0x4, fixed_abs, tag = 'smem constant byte address 0x4 - core index']
  #allocation1 [shape = 'u32[72,128]{1,0:T(1,128)}', space=vmem, size = 0x9000, scoped, tag = 'internal scratch']
  %s0 = inlined_call_operand.vmem [shape: f32[2,4,16], index: 0, kind: input, shape index: {}]
  %s1 = inlined_call_operand.vmem [shape: f32[8,4], index: 1, kind: input, shape index: {}]
  %s2 = inlined_call_operand.vmem [shape: f32[8,1], index: 2, kind: input, shape index: {}]
  %s3 = inlined_call_operand.hbm [shape: f32[2,8,16], index: 3, kind: output, shape index: {}]
  %s4 = sld [smem:[#allocation0]]
  $region45: #{attention_forward.3} parent=0
    _
  %s6 = ssub.s32 1, %s4
  %s7 = scalar_select 0, %s6, %s4
  $region1: #{attention_forward.3} parent=0
    #allocation2 [shape = 'u8[8192]{0}', space=vmem, size = 0x2000, scoped, tag = 'output window, operand 0']
    #allocation3 [shape = 's32[2]{0}', space=sflag, size = 0x8, scoped, tag = 'scoped memory for attention_forward.3']
    %8 = vsyncpa [#allocation3], 0
    %s9 = scalar_lea.sflag [#allocation3], 1
    %10 = vsyncpa %s9, 0
    loop: start=0, step=1, limit=4
    $region2: #{attention_forward.3} parent=1 // loop_pre_header
      _
    $region3: #{attention_forward.3} parent=1 // loop_header
      %s12 = sphi 0, %s16
      %p13 = scmp.ge.s32.totalorder %s12, 4
      %s19 = sphi 0, %s31
      %s20 = sphi 0, %s27
      %s21 = sphi 0, %s19
      %s22 = sphi 0, %s20
      %s23 = sphi 0, %s21
      %s24 = sphi 0, %s22
      %s36 = sphi 0, %s38
      %s39 = sphi 0, %s36
      %s40 = sphi 0, %s39
      %s56 = sphi 0, %s40
      %s60 = sphi 0, %s60
      %s62 = sphi 0, %s60
      %s63 = sphi 0, %s62
      %s77 = sphi 0, %s63
      %s81 = sphi 0, %s81
      %s83 = sphi 0, %s81
      %s84 = sphi 0, %s83
      %s98 = sphi 0, %s84
      %s106 = sphi 0, %s108
      %s109 = sphi 0, %s106
      %s110 = sphi 0, %s109
      %s126 = sphi 0, %s110
    $region4: #{attention_forward.3} parent=1 // loop_header_branch
      %15 = sbr.rel (%p13) target = $region8
    $region5: #{attention_forward.3} parent=1 // loop_body
      %s17 = ssub.s32 %s12, 1
      %s18 = ssub.s32 %s12, 2
      %s25 = sadd.s32 1, %s20
      %p26 = scmp.ge.s32.totalorder %s25, 1
      %s27 = scalar_select %p26, 0, %s25
      %s28 = sadd.s32 1, %s19
      %s29 = scalar_select %p26, %s28, %s19
      %p30 = scmp.ge.s32.totalorder %s29, 2
      %s31 = scalar_select %p30, 0, %s29
      %s32 = ssub.s32 %s19, %s31
      %s33 = ssub.s32 %s20, %s27
      %s34 = sor.u32 %s32, %s33
      %p35 = scmp.eq.s32.totalorder %s34, 0
      %s37 = sadd.s32 %s36, 1
      %s38 = scalar_select %p35, %s36, %s37
      %p41 = pneg %p35
      %p42 = scmp.eq.s32.totalorder %s12, 1
      %p43 = por %p41, %p42
      %p44 = scmp.ne.s32.totalorder %s36, %s39
      %p45 = scmp.eq.s32.totalorder %s12, 0
      %p46 = por %p44, %p45
      %p47 = scmp.ne.s32.totalorder %s36, %s39
      %p48 = scmp.eq.s32.totalorder %s17, 1
      %p49 = por %p47, %p48
      %p50 = scmp.ne.s32.totalorder %s39, %s40
      %p51 = scmp.eq.s32.totalorder %s17, 0
      %p52 = por %p50, %p51
      %p53 = scmp.ne.s32.totalorder %s39, %s40
      %p54 = scmp.eq.s32.totalorder %s18, 1
      %p55 = por %p53, %p54
      %p57 = scmp.ne.s32.totalorder %s40, %s56
      %p58 = scmp.eq.s32.totalorder %s18, 0
      %p59 = por %p57, %p58
      %s61 = sadd.s32 %s60, 1
      %p64 = scmp.eq.s32.totalorder %s12, 1
      %p65 = scmp.ne.s32.totalorder %s60, %s62
      %p66 = scmp.eq.s32.totalorder %s12, 0
      %p67 = por %p65, %p66
      %p68 = scmp.ne.s32.totalorder %s60, %s62
      %p69 = scmp.eq.s32.totalorder %s17, 1
      %p70 = por %p68, %p69
      %p71 = scmp.ne.s32.totalorder %s62, %s63
      %p72 = scmp.eq.s32.totalorder %s17, 0
      %p73 = por %p71, %p72
      %p74 = scmp.ne.s32.totalorder %s62, %s63
      %p75 = scmp.eq.s32.totalorder %s18, 1
      %p76 = por %p74, %p75
      %p78 = scmp.ne.s32.totalorder %s63, %s77
      %p79 = scmp.eq.s32.totalorder %s18, 0
      %p80 = por %p78, %p79
      %s82 = sadd.s32 %s81, 1
      %p85 = scmp.eq.s32.totalorder %s12, 1
      %p86 = scmp.ne.s32.totalorder %s81, %s83
      %p87 = scmp.eq.s32.totalorder %s12, 0
      %p88 = por %p86, %p87
      %p89 = scmp.ne.s32.totalorder %s81, %s83
      %p90 = scmp.eq.s32.totalorder %s17, 1
      %p91 = por %p89, %p90
      %p92 = scmp.ne.s32.totalorder %s83, %s84
      %p93 = scmp.eq.s32.totalorder %s17, 0
      %p94 = por %p92, %p93
      %p95 = scmp.ne.s32.totalorder %s83, %s84
      %p96 = scmp.eq.s32.totalorder %s18, 1
      %p97 = por %p95, %p96
      %p99 = scmp.ne.s32.totalorder %s84, %s98
      %p100 = scmp.eq.s32.totalorder %s18, 0
      %p101 = por %p99, %p100
      %s102 = ssub.s32 %s19, %s31
      %s103 = ssub.s32 %s20, %s27
      %s104 = sor.u32 %s102, %s103
      %p105 = scmp.eq.s32.totalorder %s104, 0
      %s107 = sadd.s32 %s106, 1
      %s108 = scalar_select %p105, %s106, %s107
      %p111 = pneg %p105
      %p112 = scmp.eq.s32.totalorder %s12, 1
      %p113 = por %p111, %p112
      %p114 = scmp.ne.s32.totalorder %s106, %s109
      %p115 = scmp.eq.s32.totalorder %s12, 0
      %p116 = por %p114, %p115
      %p117 = scmp.ne.s32.totalorder %s106, %s109
      %p118 = scmp.eq.s32.totalorder %s17, 1
      %p119 = por %p117, %p118
      %p120 = scmp.ne.s32.totalorder %s109, %s110
      %p121 = scmp.eq.s32.totalorder %s17, 0
      %p122 = por %p120, %p121
      %p123 = scmp.ne.s32.totalorder %s109, %s110
      %p124 = scmp.eq.s32.totalorder %s18, 1
      %p125 = por %p123, %p124
      %p127 = scmp.ne.s32.totalorder %s110, %s126
      %p128 = scmp.eq.s32.totalorder %s18, 0
      %p129 = por %p127, %p128
      %p130 = scmp.le.s32.totalorder 1, %s12
      %p131 = scmp.lt.s32.totalorder %s12, 3
      %p132 = pnand %p130, %p131
      %p133 = pneg %p132
      // Predicated region
      $region9: #{attention_forward.3} parent=5 // pred_check
        _
      $region10: #{attention_forward.3} parent=5 // pred_check_branch
        %135 = sbr.rel (%p132) target = $region12
      $region11: #{attention_forward.3} parent=5 // pred_region
        %s136 = ssub.s32 %s12, 1
        // Predicated region
        $region13: #{attention_forward.3} parent=11 // pred_check
          %p137 = pneg %p73
        $region14: #{attention_forward.3} parent=11 // pred_check_branch
          %139 = sbr.rel (%p137) target = $region16
        $region15: #{attention_forward.3} parent=11 // pred_region
          _
        $region16: #{attention_forward.3} parent=11 // pred_fallthru
          _
        // Predicated region
        $region17: #{attention_forward.3} parent=11 // pred_check
          %p140 = pneg %p94
        $region18: #{attention_forward.3} parent=11 // pred_check_branch
          %142 = sbr.rel (%p140) target = $region20
        $region19: #{attention_forward.3} parent=11 // pred_region
          _
        $region20: #{attention_forward.3} parent=11 // pred_fallthru
          _
      $region12: #{attention_forward.3} parent=5 // pred_fallthru
        _
      %p143 = scmp.lt.s32.totalorder %s12, 2
      // Predicated region
      $region21: #{attention_forward.3} parent=5 // pred_check
        %p144 = pneg %p143
      $region22: #{attention_forward.3} parent=5 // pred_check_branch
        %146 = sbr.rel (%p144) target = $region24
      $region23: #{attention_forward.3} parent=5 // pred_region
        // Predicated region
        $region25: #{attention_forward.3} parent=23 // pred_check
          %p147 = pneg %p46
        $region26: #{attention_forward.3} parent=23 // pred_check_branch
          %149 = sbr.rel (%p147) target = $region28
        $region27: #{attention_forward.3} parent=23 // pred_region
          %p150 = scmp.lt.s32.totalorder %s19, 1
          %s151 = scalar_select %p150, %s19, 1
          %p152 = scmp.lt.s32.totalorder %s20, 0
          %s153 = scalar_select %p152, %s20, 0
          %s154 = sadd.s32 %s153, %s151
          %s155 = smul.addr %s154, 4
          %s156 = scalar_lea.vmem %s0, %s155
        $region28: #{attention_forward.3} parent=23 // pred_fallthru
          _
      $region24: #{attention_forward.3} parent=5 // pred_fallthru
        _
      %p157 = scmp.le.s32.totalorder 1, %s12
      %p158 = scmp.lt.s32.totalorder %s12, 3
      %p159 = pnand %p157, %p158
      %p160 = pneg %p159
      // Predicated region
      $region29: #{attention_forward.3} parent=5 // pred_check
        _
      $region30: #{attention_forward.3} parent=5 // pred_check_branch
        %162 = sbr.rel (%p159) target = $region32
      $region31: #{attention_forward.3} parent=5 // pred_region
        %s163 = ssub.s32 %s12, 1
        %p164 = scmp.lt.s32.totalorder %s21, 1
        %s165 = scalar_select %p164, %s21, 1
        %p166 = scmp.lt.s32.totalorder %s22, 0
        %s167 = scalar_select %p166, %s22, 0
        %s168 = sadd.s32 %s167, %s165
        %s169 = smul.addr %s168, 4
        %s170 = scalar_lea.vmem %s0, %s169
        %p171 = pneg %p52
        %p172 = pneg %p49
        %p173 = pneg %p73
        %p174 = pneg %p70
        %p175 = pneg %p94
        %p176 = pneg %p91
        %p177 = pneg %p122
        %p178 = pneg %p119
        %s179 = sand.u32 %s109, 1
        %s180 = scalar_lea.sflag [#allocation3], %s179
        %s181 = sand.u32 %s109, 1
        %s182 = smul.addr %s181, 8
        %s183 = scalar_lea.vmem [#allocation2], %s182
        %p184 = scmp.lt.s32.totalorder %s21, 1
        %s185 = scalar_select %p184, %s21, 1
        %p186 = scmp.lt.s32.totalorder %s22, 0
        %s187 = scalar_select %p186, %s22, 0
        %s188 = sadd.s32 %s187, %s185
        %s189 = smul.addr %s188, 4
        %s190 = scalar_lea.vmem %s0, %s189
        %v191 = vld [vmem:[%s190] sm:$0xf]
        %v192 = vld [vmem:[%s1] sm:$0xff]
        %194 = vset.pattern.permute.xlu0 0
        %195 = vperm.xlu0 %194, %v192
        %v196 = vpop.permute.xlu0 %195
        %v198 = vperm.slane %v191, 0
        %v199 = vmul.f32 %v196, %v198
        %200 = vset.pattern.permute.xlu0 1
        %201 = vperm.xlu0 %200, %v192
        %v202 = vpop.permute.xlu0 %201
        %v204 = vperm.slane %v191, 1
        %v205 = vmul.f32 %v202, %v204
        %v206 = vadd.f32 %v199, %v205
        %207 = vset.pattern.permute.xlu0 2
        %208 = vperm.xlu0 %207, %v192
        %v209 = vpop.permute.xlu0 %208
        %v211 = vperm.slane %v191, 2
        %v212 = vmul.f32 %v209, %v211
        %v213 = vadd.f32 %v206, %v212
        %214 = vset.pattern.permute.xlu0 3
        %215 = vperm.xlu0 %214, %v192
        %v216 = vpop.permute.xlu0 %215
        %v218 = vperm.slane %v191, 3
        %v219 = vmul.f32 %v216, %v218
        %v220 = vadd.f32 %v213, %v219
        %v221 = vld [vmem:[%s2] sm:$0xff]
        %223 = vset.pattern.permute.xlu0 0
        %224 = vperm.xlu0 %223, %v221
        %v225 = vpop.permute.xlu0 %224
        %v227 = vadd.f32 %v220, %v225
        %v228 = vmul.f32 %v227, 0.5
        %v229 = vtanh.pop %v228
        %v230 = vmul.f32 %v229, 0.5
        %v231 = vadd.f32 %v230, 0.5
        %vm232 = vcmask 130048
        %233 = vst.msk [vmem:[%s183] sm:$0xff] %vm232, %v231
        %s234 = sand.u32 %s109, 1
        %s235 = scalar_lea.sflag [#allocation3], %s234
        %s236 = sand.u32 %s109, 1
        %s237 = smul.addr %s236, 8
        %s238 = scalar_lea.vmem [#allocation2], %s237
        // Predicated region
        $region33: #{attention_forward.3} parent=31 // pred_check
          %p239 = pneg %p119
        $region34: #{attention_forward.3} parent=31 // pred_check_branch
          %241 = sbr.rel (%p239) target = $region36
        $region35: #{attention_forward.3} parent=31 // pred_region
          %243 = vsyncadd %s235, 0
          %s244 = sadd.s32 %s22, %s21
          %s245 = smul.addr %s244, 8
          %s246 = scalar_lea.hbm %s3, %s245
          %s248 = sshll.u32 %s238, 4
          %s249 = int_to_ptr.vmem [resolvable:$true] %s248
          %s250 = sshll.u32 %s246, 4
          %s251 = int_to_ptr.hbm [resolvable:$true] %s250
          %253 = dma.vmem_to_hbm [thread:$0]  %s249, 128, %s251, %s235
        $region36: #{attention_forward.3} parent=31 // pred_fallthru
          _
      $region32: #{attention_forward.3} parent=5 // pred_fallthru
        _
      %p254 = scmp.le.s32.totalorder 2, %s12
      // Predicated region
      $region37: #{attention_forward.3} parent=5 // pred_check
        %p255 = pneg %p254
      $region38: #{attention_forward.3} parent=5 // pred_check_branch
        %257 = sbr.rel (%p255) target = $region40
      $region39: #{attention_forward.3} parent=5 // pred_region
        %s258 = ssub.s32 %s12, 2
        // Predicated region
        $region41: #{attention_forward.3} parent=39 // pred_check
          %p259 = pneg %p125
        $region42: #{attention_forward.3} parent=39 // pred_check_branch
          %261 = sbr.rel (%p259) target = $region44
        $region43: #{attention_forward.3} parent=39 // pred_region
          %s262 = sand.u32 %s110, 1
          %s263 = scalar_lea.sflag [#allocation3], %s262
          %s264 = sand.u32 %s110, 1
          %s265 = smul.addr %s264, 8
          %s266 = scalar_lea.vmem [#allocation2], %s265
          %268 = dma.done %s263, 128
        $region44: #{attention_forward.3} parent=39 // pred_fallthru
          _
      $region40: #{attention_forward.3} parent=5 // pred_fallthru
        _
    $region6: #{attention_forward.3} parent=1 // loop_footer
      %s16 = sadd.s32 1, %s12
    $region7: #{attention_forward.3} parent=1 // loop_footer_branch
      %11 = sbr.rel target = $region3
    $region8: #{attention_forward.3} parent=1 // loop_exit
      _
    %269 = vsyncpa [#allocation3], 1
    %s270 = scalar_lea.sflag [#allocation3], 1
    %271 = vsyncpa %s270, 1

</llo_original>
